<compile_context>
chip_gen: v6e
topology: v6e:2x2x1
jax: 0.10.0
libtpu: 0.0.40
codegen_flags: <defaults>
</compile_context>

<pallas_src>
import jax
import jax.numpy as jnp
from jax.experimental import pallas as pl
from jax.experimental.pallas import tpu as pltpu


def _rope_kernel(cos_ref, sin_ref, x_ref, o_ref):
    # cos_ref/sin_ref: (TS, half) f32 trig tables (block index constant over the
    #                  inner batch axis -> fetched once per s-tile).
    # x_ref/o_ref:     (1, TS, D) activation tiles.
    half = cos_ref.shape[-1]

    x = x_ref[...]
    xl = x[:, :, :half].astype(jnp.float32)   # (1, TS, half)
    xr = x[:, :, half:].astype(jnp.float32)   # (1, TS, half)

    c = cos_ref[...]                           # (TS, half), broadcasts over leading 1
    s = sin_ref[...]

    new_l = xl * c - xr * s
    # Reference reuses the UPDATED x_left for the right half (freq_left == freq_right).
    new_r = new_l * s + xr * c

    # Single full-width, lane-dense store (avoids two masked partial stores when
    # half % 128 != 0; a no-op placement when half is already lane-aligned).
    o_ref[...] = jnp.concatenate([new_l, new_r], axis=-1).astype(o_ref.dtype)


def _trig_tables(freq, seq_len):
    """(S, half) f32 cos/sin tables, hoisted out of the kernel (computed once in XLA)."""
    t = jnp.arange(seq_len, dtype=jnp.float32)
    freqs = jnp.einsum("i,j->ij", t, freq.astype(jnp.float32))   # (S, half)
    return jnp.cos(freqs), jnp.sin(freqs)


def rotary_embedding(x, freq, *, vmem_budget_bytes=24 * 1024 * 1024, seq_tile=None):
    """Apply the module's rotary embedding to x.

    x:    (B, S, D) float32 or bfloat16
    freq: (D//2,)   the shared frequency buffer (the module registers identical
                    freq_left / freq_right buffers, so one vector drives both
                    rotations).
    seq_tile: optional explicit sequence-tile override (mostly for tests); by
              default the tile is derived from `vmem_budget_bytes`.
    """
    B, S, D = x.shape
    assert D % 2 == 0, "n_embd must be even"
    half = D // 2

    cos_t, sin_t = _trig_tables(freq, S)

    # --- Sequence tile from a VMEM budget (dtype / D aware) -------------------
    # Double-buffered per-row VMEM bytes:
    #   x + o tiles : 2 arrays * 2 buffers * D    * itemsize
    #   cos + sin   : 2 arrays * 2 buffers * half * 4 (f32)
    itemsize = jnp.dtype(x.dtype).itemsize
    per_row = 4 * D * itemsize + 4 * half * 4
    budget_rows = max(8, int(vmem_budget_bytes) // per_row)
    limit = budget_rows if seq_tile is None else int(seq_tile)
    if S <= limit:
        TS = S                                   # block dim == array dim: always legal
    else:
        TS = max(8, (limit // 8) * 8)            # tiled: keep sublane (8) alignment

    # Batch is the INNER grid axis so the table blocks stay resident per s-tile.
    grid = (pl.cdiv(S, TS), B)

    tbl_spec = pl.BlockSpec((TS, half), lambda s, b: (s, 0))
    act_spec = pl.BlockSpec((1, TS, D), lambda s, b: (b, s, 0))

    return pl.pallas_call(
        _rope_kernel,
        out_shape=jax.ShapeDtypeStruct((B, S, D), x.dtype),
        grid_spec=pltpu.PrefetchScalarGridSpec(
            num_scalar_prefetch=0,
            grid=grid,
            in_specs=[tbl_spec, tbl_spec, act_spec],
            out_specs=act_spec,
        ),
        compiler_params=pltpu.CompilerParams(
            # s-tiles can be split across TensorCores (v7x); batch stays a sequential
            # inner loop so per-core table-block reuse is preserved.
            dimension_semantics=("parallel", "arbitrary"),
            vmem_limit_bytes=48 * 1024 * 1024,
        ),
    )(cos_t, sin_t, x)


def make_freq_buffers(n_embd):
    """Exactly the module's registered buffers: 10000 ** ((arange/dim) // 2)."""
    half = n_embd // 2
    ar = jnp.arange(half, dtype=jnp.float32)
    exponent = jnp.floor((ar / n_embd) / 2.0)    # == 0 for every entry
    freq = jnp.power(10000.0, exponent)
    return freq, freq  # freq_left, freq_right (identical buffers in the module)


def rotary_embedding_ref(x, freq_left, freq_right):
    """Pure-JAX reference mirroring the PyTorch forward exactly."""
    S = x.shape[-2]
    half = freq_left.shape[0]
    t = jnp.arange(S, dtype=jnp.float32)
    freqs_l = jnp.einsum("i,j->ij", t, freq_left.astype(jnp.float32))
    freqs_r = jnp.einsum("i,j->ij", t, freq_right.astype(jnp.float32))
    x_left, x_right = x[..., :half], x[..., half:]
    x_left = x_left * jnp.cos(freqs_l) - x_right * jnp.sin(freqs_l)
    x_right = x_left * jnp.sin(freqs_r) + x_right * jnp.cos(freqs_r)
    return jnp.concatenate([x_left, x_right], axis=-1)


if __name__ == "__main__":
    key = jax.random.PRNGKey(0)
    k1, k2 = jax.random.split(key)

    # --- Test 1: small module-sized demo --------------------------------------
    B, S, n_embd = 2, 8, 32
    x = jax.random.normal(k1, (B, S, n_embd), dtype=jnp.float32)
    freq_left, freq_right = make_freq_buffers(n_embd)

    out = jax.block_until_ready(rotary_embedding(x, freq_left))
    ref = rotary_embedding_ref(x, freq_left, freq_right)
    assert out.shape == x.shape and out.dtype == x.dtype
    assert jnp.allclose(out, ref, atol=1e-5, rtol=1e-5)

    # --- Test 2: ragged sequence tiling (S % TS != 0) + batch-inner grid loop --
    B2, S2, D2 = 3, 20, 64
    x2 = jax.random.normal(k2, (B2, S2, D2), dtype=jnp.float32)
    fl2, fr2 = make_freq_buffers(D2)
    out2 = jax.block_until_ready(rotary_embedding(x2, fl2, seq_tile=16))
    ref2 = rotary_embedding_ref(x2, fl2, fr2)
    assert out2.shape == x2.shape and out2.dtype == x2.dtype
    assert jnp.allclose(out2, ref2, atol=1e-5, rtol=1e-5)

    print("KERNEL_OK")
</pallas_src>

<mosaic_0001>
module attributes {stable_mosaic.version = 11 : i64} {
  func.func @_rope_kernel(%arg0: i32, %arg1: i32, %arg2: memref<8x16xf32, #tpu.memory_space<vmem>>, %arg3: memref<8x16xf32, #tpu.memory_space<vmem>>, %arg4: memref<1x8x32xf32, #tpu.memory_space<vmem>>, %arg5: memref<1x8x32xf32, #tpu.memory_space<vmem>>) attributes {dimension_semantics = [#tpu.dimension_semantics<parallel>, #tpu.dimension_semantics<arbitrary>], iteration_bounds = array<i64: 1, 2>, scalar_prefetch = 0 : i64, scratch_operands = 0 : i64, tpu.core_type = #tpu.core_type<tc>, window_params = [{transform_indices = @transform_0, window_bounds = array<i64: 8, 16>}, {transform_indices = @transform_1, window_bounds = array<i64: 8, 16>}, {transform_indices = @transform_2, window_bounds = array<i64: 1, 8, 32>}, {transform_indices = @transform_3, window_bounds = array<i64: 1, 8, 32>}]} {
    %c0 = arith.constant 0 : index
    %c0_0 = arith.constant 0 : index
    %c0_1 = arith.constant 0 : index
    %0 = vector.load %arg4[%c0, %c0_0, %c0_1] : memref<1x8x32xf32, #tpu.memory_space<vmem>>, vector<1x8x32xf32>
    %1 = vector.extract_strided_slice %0 {offsets = [0, 0, 0], sizes = [1, 8, 16], strides = [1, 1, 1]} : vector<1x8x32xf32> to vector<1x8x16xf32>
    %2 = vector.extract_strided_slice %0 {offsets = [0, 0, 16], sizes = [1, 8, 16], strides = [1, 1, 1]} : vector<1x8x32xf32> to vector<1x8x16xf32>
    %c0_2 = arith.constant 0 : index
    %c0_3 = arith.constant 0 : index
    %3 = vector.load %arg2[%c0_2, %c0_3] : memref<8x16xf32, #tpu.memory_space<vmem>>, vector<8x16xf32>
    %c0_4 = arith.constant 0 : index
    %c0_5 = arith.constant 0 : index
    %4 = vector.load %arg3[%c0_4, %c0_5] : memref<8x16xf32, #tpu.memory_space<vmem>>, vector<8x16xf32>
    %5 = vector.shape_cast %3 : vector<8x16xf32> to vector<1x8x16xf32>
    %6 = arith.mulf %1, %5 : vector<1x8x16xf32>
    %7 = vector.shape_cast %4 : vector<8x16xf32> to vector<1x8x16xf32>
    %8 = arith.mulf %2, %7 : vector<1x8x16xf32>
    %9 = arith.subf %6, %8 : vector<1x8x16xf32>
    %10 = vector.shape_cast %4 : vector<8x16xf32> to vector<1x8x16xf32>
    %11 = arith.mulf %9, %10 : vector<1x8x16xf32>
    %12 = vector.shape_cast %3 : vector<8x16xf32> to vector<1x8x16xf32>
    %13 = arith.mulf %2, %12 : vector<1x8x16xf32>
    %14 = arith.addf %11, %13 : vector<1x8x16xf32>
    %15 = tpu.concatenate %9, %14 in 2 : vector<1x8x16xf32>, vector<1x8x16xf32> -> vector<1x8x32xf32>
    %c0_6 = arith.constant 0 : index
    %c0_7 = arith.constant 0 : index
    %c0_8 = arith.constant 0 : index
    %16 = vector.load %arg5[%c0_6, %c0_7, %c0_8] : memref<1x8x32xf32, #tpu.memory_space<vmem>>, vector<1x8x32xf32>
    tpu.vector_store %arg5[%c0_6, %c0_7, %c0_8], %15 {strides = array<i32>} : memref<1x8x32xf32, #tpu.memory_space<vmem>>, vector<1x8x32xf32>,
    return
  }
  func.func @transform_0(%arg0: i32, %arg1: i32) -> (i32, i32) {
    %c0_i32 = arith.constant 0 : i32
    %c0_i32_0 = arith.constant 0 : i32
    return %arg0, %c0_i32 : i32, i32
  }
  func.func @transform_1(%arg0: i32, %arg1: i32) -> (i32, i32) {
    %c0_i32 = arith.constant 0 : i32
    %c0_i32_0 = arith.constant 0 : i32
    return %arg0, %c0_i32 : i32, i32
  }
  func.func @transform_2(%arg0: i32, %arg1: i32) -> (i32, i32, i32) {
    %c0_i32 = arith.constant 0 : i32
    %c0_i32_0 = arith.constant 0 : i32
    return %arg1, %arg0, %c0_i32 : i32, i32, i32
  }
  func.func @transform_3(%arg0: i32, %arg1: i32) -> (i32, i32, i32) {
    %c0_i32 = arith.constant 0 : i32
    %c0_i32_0 = arith.constant 0 : i32
    return %arg1, %arg0, %c0_i32 : i32, i32, i32
  }
}

</mosaic_0001>

<llo_original>
// kernel: tpu_custom_call.1
$region0: #{tpu_custom_call.1}
  #allocation0 [shape = 'u32[]', space=smem, size = 0x4, offset = 0x4, fixed_abs, tag = 'smem constant byte address 0x4 - core index']
  #allocation1 [shape = 'u32[144,128]{1,0:T(1,128)}', space=vmem, size = 0x12000, scoped, tag = 'internal scratch']
  %s0 = inlined_call_operand.hbm [shape: f32[8,16], index: 0, kind: input, shape index: {}]
  %s1 = inlined_call_operand.hbm [shape: f32[8,16], index: 1, kind: input, shape index: {}]
  %s2 = inlined_call_operand.hbm [shape: f32[2,8,32], index: 2, kind: input, shape index: {}]
  %s3 = inlined_call_operand.hbm [shape: f32[2,8,32], index: 3, kind: output, shape index: {}]
  %s4 = sld [smem:[#allocation0]]
  $region57: #{tpu_custom_call.1} parent=0
    _
  %s6 = ssub.s32 1, %s4
  %s7 = scalar_select 0, %s6, %s4
  $region1: #{tpu_custom_call.1} parent=0
    #allocation2 [shape = 'u8[4096]{0}', space=vmem, size = 0x1000, scoped, tag = 'input window, operand 0, single buffered']
    #allocation3 [shape = 's32[2]{0}', space=sflag, size = 0x8, scoped, tag = 'scoped memory for tpu_custom_call.1']
    #allocation4 [shape = 's32[2]{0}', space=sflag, size = 0x8, scoped, tag = 'scoped memory for tpu_custom_call.1']
    #allocation5 [shape = 'u8[4096]{0}', space=vmem, size = 0x1000, scoped, tag = 'input window, operand 1, single buffered']
    #allocation6 [shape = 's32[1]{0}', space=sflag, size = 0x4, scoped, tag = 'scoped memory for tpu_custom_call.1']
    #allocation7 [shape = 'u8[8192]{0}', space=vmem, size = 0x2000, scoped, tag = 'input window, operand 2']
    #allocation8 [shape = 'u8[8192]{0}', space=vmem, size = 0x2000, scoped, tag = 'output window, operand 0']
    %8 = vsyncpa [#allocation3], 0
    %9 = vsyncpa [#allocation6], 0
    %10 = vsyncpa [#allocation4], 0
    %s11 = scalar_lea.sflag [#allocation4], 1
    %12 = vsyncpa %s11, 0
    loop: start=0, step=1, limit=4
    $region2: #{tpu_custom_call.1} parent=1 // loop_pre_header
      _
    $region3: #{tpu_custom_call.1} parent=1 // loop_header
      %s14 = sphi 0, %s18
      %p15 = scmp.ge.s32.totalorder %s14, 4
      %s21 = sphi 0, %s33
      %s22 = sphi 0, %s29
      %s23 = sphi 0, %s21
      %s24 = sphi 0, %s22
      %s25 = sphi 0, %s23
      %s26 = sphi 0, %s24
      %s36 = sphi 0, %s38
      %s39 = sphi 0, %s36
      %s40 = sphi 0, %s39
      %s56 = sphi 0, %s40
      %s62 = sphi 0, %s64
      %s65 = sphi 0, %s62
      %s66 = sphi 0, %s65
      %s82 = sphi 0, %s66
      %s90 = sphi 0, %s92
      %s93 = sphi 0, %s90
      %s94 = sphi 0, %s93
      %s110 = sphi 0, %s94
      %s118 = sphi 0, %s120
      %s121 = sphi 0, %s118
      %s122 = sphi 0, %s121
      %s138 = sphi 0, %s122
    $region4: #{tpu_custom_call.1} parent=1 // loop_header_branch
      %17 = sbr.rel (%p15) target = $region8
    $region5: #{tpu_custom_call.1} parent=1 // loop_body
      %s19 = ssub.s32 %s14, 1
      %s20 = ssub.s32 %s14, 2
      %s27 = sadd.s32 1, %s22
      %p28 = scmp.ge.s32.totalorder %s27, 2
      %s29 = scalar_select %p28, 0, %s27
      %s30 = sadd.s32 1, %s21
      %s31 = scalar_select %p28, %s30, %s21
      %p32 = scmp.ge.s32.totalorder %s31, 1
      %s33 = scalar_select %p32, 0, %s31
      %s34 = ssub.s32 %s21, %s33
      %p35 = scmp.eq.s32.totalorder %s34, 0
      %s37 = sadd.s32 %s36, 1
      %s38 = scalar_select %p35, %s36, %s37
      %p41 = pneg %p35
      %p42 = scmp.eq.s32.totalorder %s14, 1
      %p43 = por %p41, %p42
      %p44 = scmp.ne.s32.totalorder %s36, %s39
      %p45 = scmp.eq.s32.totalorder %s14, 0
      %p46 = por %p44, %p45
      %p47 = scmp.ne.s32.totalorder %s36, %s39
      %p48 = scmp.eq.s32.totalorder %s19, 1
      %p49 = por %p47, %p48
      %p50 = scmp.ne.s32.totalorder %s39, %s40
      %p51 = scmp.eq.s32.totalorder %s19, 0
      %p52 = por %p50, %p51
      %p53 = scmp.ne.s32.totalorder %s39, %s40
      %p54 = scmp.eq.s32.totalorder %s20, 1
      %p55 = por %p53, %p54
      %p57 = scmp.ne.s32.totalorder %s40, %s56
      %p58 = scmp.eq.s32.totalorder %s20, 0
      %p59 = por %p57, %p58
      %s60 = ssub.s32 %s21, %s33
      %p61 = scmp.eq.s32.totalorder %s60, 0
      %s63 = sadd.s32 %s62, 1
      %s64 = scalar_select %p61, %s62, %s63
      %p67 = pneg %p61
      %p68 = scmp.eq.s32.totalorder %s14, 1
      %p69 = por %p67, %p68
      %p70 = scmp.ne.s32.totalorder %s62, %s65
      %p71 = scmp.eq.s32.totalorder %s14, 0
      %p72 = por %p70, %p71
      %p73 = scmp.ne.s32.totalorder %s62, %s65
      %p74 = scmp.eq.s32.totalorder %s19, 1
      %p75 = por %p73, %p74
      %p76 = scmp.ne.s32.totalorder %s65, %s66
      %p77 = scmp.eq.s32.totalorder %s19, 0
      %p78 = por %p76, %p77
      %p79 = scmp.ne.s32.totalorder %s65, %s66
      %p80 = scmp.eq.s32.totalorder %s20, 1
      %p81 = por %p79, %p80
      %p83 = scmp.ne.s32.totalorder %s66, %s82
      %p84 = scmp.eq.s32.totalorder %s20, 0
      %p85 = por %p83, %p84
      %s86 = ssub.s32 %s22, %s29
      %s87 = ssub.s32 %s21, %s33
      %s88 = sor.u32 %s86, %s87
      %p89 = scmp.eq.s32.totalorder %s88, 0
      %s91 = sadd.s32 %s90, 1
      %s92 = scalar_select %p89, %s90, %s91
      %p95 = pneg %p89
      %p96 = scmp.eq.s32.totalorder %s14, 1
      %p97 = por %p95, %p96
      %p98 = scmp.ne.s32.totalorder %s90, %s93
      %p99 = scmp.eq.s32.totalorder %s14, 0
      %p100 = por %p98, %p99
      %p101 = scmp.ne.s32.totalorder %s90, %s93
      %p102 = scmp.eq.s32.totalorder %s19, 1
      %p103 = por %p101, %p102
      %p104 = scmp.ne.s32.totalorder %s93, %s94
      %p105 = scmp.eq.s32.totalorder %s19, 0
      %p106 = por %p104, %p105
      %p107 = scmp.ne.s32.totalorder %s93, %s94
      %p108 = scmp.eq.s32.totalorder %s20, 1
      %p109 = por %p107, %p108
      %p111 = scmp.ne.s32.totalorder %s94, %s110
      %p112 = scmp.eq.s32.totalorder %s20, 0
      %p113 = por %p111, %p112
      %s114 = ssub.s32 %s22, %s29
      %s115 = ssub.s32 %s21, %s33
      %s116 = sor.u32 %s114, %s115
      %p117 = scmp.eq.s32.totalorder %s116, 0
      %s119 = sadd.s32 %s118, 1
      %s120 = scalar_select %p117, %s118, %s119
      %p123 = pneg %p117
      %p124 = scmp.eq.s32.totalorder %s14, 1
      %p125 = por %p123, %p124
      %p126 = scmp.ne.s32.totalorder %s118, %s121
      %p127 = scmp.eq.s32.totalorder %s14, 0
      %p128 = por %p126, %p127
      %p129 = scmp.ne.s32.totalorder %s118, %s121
      %p130 = scmp.eq.s32.totalorder %s19, 1
      %p131 = por %p129, %p130
      %p132 = scmp.ne.s32.totalorder %s121, %s122
      %p133 = scmp.eq.s32.totalorder %s19, 0
      %p134 = por %p132, %p133
      %p135 = scmp.ne.s32.totalorder %s121, %s122
      %p136 = scmp.eq.s32.totalorder %s20, 1
      %p137 = por %p135, %p136
      %p139 = scmp.ne.s32.totalorder %s122, %s138
      %p140 = scmp.eq.s32.totalorder %s20, 0
      %p141 = por %p139, %p140
      %p142 = scmp.le.s32.totalorder 1, %s14
      %p143 = scmp.lt.s32.totalorder %s14, 3
      %p144 = pnand %p142, %p143
      %p145 = pneg %p144
      // Predicated region
      $region9: #{tpu_custom_call.1} parent=5 // pred_check
        _
      $region10: #{tpu_custom_call.1} parent=5 // pred_check_branch
        %147 = sbr.rel (%p144) target = $region12
      $region11: #{tpu_custom_call.1} parent=5 // pred_region
        %s148 = ssub.s32 %s14, 1
        // Predicated region
        $region13: #{tpu_custom_call.1} parent=11 // pred_check
          %p149 = pneg %p52
        $region14: #{tpu_custom_call.1} parent=11 // pred_check_branch
          %151 = sbr.rel (%p149) target = $region16
        $region15: #{tpu_custom_call.1} parent=11 // pred_region
          %s153 = ssub.s32 128, 128
          %154 = vsyncadd [#allocation3], %s153
          %s155 = smul.addr %s23, 128
          %s156 = scalar_lea.hbm %s0, %s155
          %s158 = sshll.u32 [#allocation2], 4
          %s159 = int_to_ptr.vmem [resolvable:$true] %s158
          %161 = dma.hbm_to_vmem [thread:$0]  %s156, 128, %s159, [#allocation3]
        $region16: #{tpu_custom_call.1} parent=11 // pred_fallthru
          _
        // Predicated region
        $region17: #{tpu_custom_call.1} parent=11 // pred_check
          %p162 = pneg %p78
        $region18: #{tpu_custom_call.1} parent=11 // pred_check_branch
          %164 = sbr.rel (%p162) target = $region20
        $region19: #{tpu_custom_call.1} parent=11 // pred_region
          %s166 = ssub.s32 128, 128
          %167 = vsyncadd [#allocation6], %s166
          %s168 = smul.addr %s23, 128
          %s169 = scalar_lea.hbm %s1, %s168
          %s171 = sshll.u32 [#allocation5], 4
          %s172 = int_to_ptr.vmem [resolvable:$true] %s171
          %174 = dma.hbm_to_vmem [thread:$0]  %s169, 128, %s172, [#allocation6]
        $region20: #{tpu_custom_call.1} parent=11 // pred_fallthru
          _
      $region12: #{tpu_custom_call.1} parent=5 // pred_fallthru
        _
      %p175 = scmp.lt.s32.totalorder %s14, 2
      // Predicated region
      $region21: #{tpu_custom_call.1} parent=5 // pred_check
        %p176 = pneg %p175
      $region22: #{tpu_custom_call.1} parent=5 // pred_check_branch
        %178 = sbr.rel (%p176) target = $region24
      $region23: #{tpu_custom_call.1} parent=5 // pred_region
        // Predicated region
        $region25: #{tpu_custom_call.1} parent=23 // pred_check
          %p179 = pneg %p100
        $region26: #{tpu_custom_call.1} parent=23 // pred_check_branch
          %181 = sbr.rel (%p179) target = $region28
        $region27: #{tpu_custom_call.1} parent=23 // pred_region
          %s182 = sand.u32 %s14, 1
          %s183 = scalar_lea.sflag [#allocation3], %s182
          %s184 = sand.u32 %s90, 1
          %s185 = smul.addr %s184, 8
          %s186 = scalar_lea.vmem [#allocation7], %s185
          %s188 = ssub.s32 128, 128
          %189 = vsyncadd %s183, %s188
          %s190 = sadd.s32 %s21, %s22
          %s191 = smul.addr %s190, 128
          %s192 = scalar_lea.hbm %s2, %s191
          %s194 = sshll.u32 %s186, 4
          %s195 = int_to_ptr.vmem [resolvable:$true] %s194
          %197 = dma.hbm_to_vmem [thread:$0]  %s192, 128, %s195, %s183
        $region28: #{tpu_custom_call.1} parent=23 // pred_fallthru
          _
      $region24: #{tpu_custom_call.1} parent=5 // pred_fallthru
        _
      %p198 = scmp.le.s32.totalorder 1, %s14
      %p199 = scmp.lt.s32.totalorder %s14, 3
      %p200 = pnand %p198, %p199
      %p201 = pneg %p200
      // Predicated region
      $region29: #{tpu_custom_call.1} parent=5 // pred_check
        _
      $region30: #{tpu_custom_call.1} parent=5 // pred_check_branch
        %203 = sbr.rel (%p200) target = $region32
      $region31: #{tpu_custom_call.1} parent=5 // pred_region
        %s204 = ssub.s32 %s14, 1
        // Predicated region
        $region33: #{tpu_custom_call.1} parent=31 // pred_check
          %p205 = pneg %p52
        $region34: #{tpu_custom_call.1} parent=31 // pred_check_branch
          %207 = sbr.rel (%p205) target = $region36
        $region35: #{tpu_custom_call.1} parent=31 // pred_region
          %208 = dma.done [#allocation3], 128
        $region36: #{tpu_custom_call.1} parent=31 // pred_fallthru
          _
        // Predicated region
        $region37: #{tpu_custom_call.1} parent=31 // pred_check
          %p209 = pneg %p78
        $region38: #{tpu_custom_call.1} parent=31 // pred_check_branch
          %211 = sbr.rel (%p209) target = $region40
        $region39: #{tpu_custom_call.1} parent=31 // pred_region
          %212 = dma.done [#allocation6], 128
        $region40: #{tpu_custom_call.1} parent=31 // pred_fallthru
          _
        %s213 = sand.u32 %s19, 1
        %s214 = scalar_lea.sflag [#allocation3], %s213
        %s215 = sand.u32 %s93, 1
        %s216 = smul.addr %s215, 8
        %s217 = scalar_lea.vmem [#allocation7], %s216
        // Predicated region
        $region41: #{tpu_custom_call.1} parent=31 // pred_check
          %p218 = pneg %p106
        $region42: #{tpu_custom_call.1} parent=31 // pred_check_branch
          %220 = sbr.rel (%p218) target = $region44
        $region43: #{tpu_custom_call.1} parent=31 // pred_region
          %221 = dma.done %s214, 128
        $region44: #{tpu_custom_call.1} parent=31 // pred_fallthru
          _
        %p222 = pneg %p52
        %p223 = pneg %p49
        %p224 = pneg %p78
        %p225 = pneg %p75
        %s226 = sand.u32 %s19, 1
        %s227 = scalar_lea.sflag [#allocation3], %s226
        %s228 = sand.u32 %s93, 1
        %s229 = smul.addr %s228, 8
        %s230 = scalar_lea.vmem [#allocation7], %s229
        %p231 = pneg %p106
        %p232 = pneg %p103
        %p233 = pneg %p134
        %p234 = pneg %p131
        %s235 = sand.u32 %s121, 1
        %s236 = scalar_lea.sflag [#allocation4], %s235
        %s237 = sand.u32 %s121, 1
        %s238 = smul.addr %s237, 8
        %s239 = scalar_lea.vmem [#allocation8], %s238
        %v240 = vld [vmem:[%s217] sm:$0xff]
        %v241 = vld [vmem:[#allocation2] sm:$0xff]
        %v242 = vld [vmem:[#allocation5] sm:$0xff]
        %v243 = vmul.f32 %v240, %v241
        %245 = vrot.lane.b32.xlu0 %v242, 16
        %v246 = vpop.permute.xlu0 %245
        %v248 = vmul.f32 %v240, %v246
        %250 = vrot.lane.b32.xlu0 %v248, 112
        %v251 = vpop.permute.xlu0 %250
        %v253 = vsub.f32 %v243, %v251
        %v254 = vmul.f32 %v253, %v242
        %256 = vrot.lane.b32.xlu0 %v241, 16
        %v257 = vpop.permute.xlu0 %256
        %v259 = vmul.f32 %v240, %v257
        %261 = vrot.lane.b32.xlu0 %v259, 112
        %v262 = vpop.permute.xlu0 %261
        %v264 = vadd.f32 %v254, %v262
        %266 = vrot.lane.b32.xlu0 %v264, 16
        %v267 = vpop.permute.xlu0 %266
        %vm269 = vcmask 130048
        %v270 = vsel %vm269, %v253, %v267
        %vm271 = vcmask 261120
        %272 = vst.msk [vmem:[%s239] sm:$0xff] %vm271, %v270
        %s273 = sand.u32 %s121, 1
        %s274 = scalar_lea.sflag [#allocation4], %s273
        %s275 = sand.u32 %s121, 1
        %s276 = smul.addr %s275, 8
        %s277 = scalar_lea.vmem [#allocation8], %s276
        // Predicated region
        $region45: #{tpu_custom_call.1} parent=31 // pred_check
          %p278 = pneg %p131
        $region46: #{tpu_custom_call.1} parent=31 // pred_check_branch
          %280 = sbr.rel (%p278) target = $region48
        $region47: #{tpu_custom_call.1} parent=31 // pred_region
          %s282 = ssub.s32 128, 128
          %283 = vsyncadd %s274, %s282
          %s284 = sadd.s32 %s23, %s24
          %s285 = smul.addr %s284, 128
          %s286 = scalar_lea.hbm %s3, %s285
          %s288 = sshll.u32 %s277, 4
          %s289 = int_to_ptr.vmem [resolvable:$true] %s288
          %291 = dma.vmem_to_hbm [thread:$0]  %s289, 128, %s286, %s274
        $region48: #{tpu_custom_call.1} parent=31 // pred_fallthru
          _
      $region32: #{tpu_custom_call.1} parent=5 // pred_fallthru
        _
      %p292 = scmp.le.s32.totalorder 2, %s14
      // Predicated region
      $region49: #{tpu_custom_call.1} parent=5 // pred_check
        %p293 = pneg %p292
      $region50: #{tpu_custom_call.1} parent=5 // pred_check_branch
        %295 = sbr.rel (%p293) target = $region52
      $region51: #{tpu_custom_call.1} parent=5 // pred_region
        %s296 = ssub.s32 %s14, 2
        // Predicated region
        $region53: #{tpu_custom_call.1} parent=51 // pred_check
          %p297 = pneg %p137
        $region54: #{tpu_custom_call.1} parent=51 // pred_check_branch
          %299 = sbr.rel (%p297) target = $region56
        $region55: #{tpu_custom_call.1} parent=51 // pred_region
          %s300 = sand.u32 %s122, 1
          %s301 = scalar_lea.sflag [#allocation4], %s300
          %s302 = sand.u32 %s122, 1
          %s303 = smul.addr %s302, 8
          %s304 = scalar_lea.vmem [#allocation8], %s303
          %305 = dma.done %s301, 128
        $region56: #{tpu_custom_call.1} parent=51 // pred_fallthru
          _
      $region52: #{tpu_custom_call.1} parent=5 // pred_fallthru
        _
    $region6: #{tpu_custom_call.1} parent=1 // loop_footer
      %s18 = sadd.s32 1, %s14
    $region7: #{tpu_custom_call.1} parent=1 // loop_footer_branch
      %13 = sbr.rel target = $region3
    $region8: #{tpu_custom_call.1} parent=1 // loop_exit
      _
    %306 = vsyncpa [#allocation3], 1
    %s307 = scalar_lea.sflag [#allocation3], 1
    %308 = vsyncpa %s307, 1
    %309 = vsyncpa [#allocation6], 1
    %310 = vsyncpa [#allocation4], 1
    %s311 = scalar_lea.sflag [#allocation4], 1
    %312 = vsyncpa %s311, 1

</llo_original>
